<compile_context>
chip_gen: v5e
topology: v5e:2x2
jax: 0.10.0
libtpu: 0.0.40
codegen_flags: <defaults>
</compile_context>

<pallas_src>
import functools
import math

import jax
import jax.numpy as jnp
from jax import lax
from jax.experimental import pallas as pl
from jax.experimental.pallas import tpu as pltpu


def _bias_norm_kernel_dense(scale_ref, bias_ref, x_ref, o_ref):
    """One (TM, C) tile with C a multiple of 128: plain per-row mean."""
    x = x_ref[...].astype(jnp.float32)
    d = x - bias_ref[...]
    mean = jnp.mean(d * d, axis=-1, keepdims=True)          # (TM, 1) XLU reduce
    inv = lax.rsqrt(mean) * scale_ref[0]                    # EUP rsqrt on a column
    o_ref[...] = (x * inv).astype(o_ref.dtype)


def _bias_norm_kernel_packed(scale_ref, bias_ref, sel_ref, selt_ref, x_ref, o_ref,
                             *, channels):
    """One (TM, W) tile, W = g*C a multiple of 128; g logical rows per tile row.

    sel (W, g) / sel_t (g, W) are block-diagonal 0/1 selectors (tiny resident
    VMEM inputs): the per-logical-row mean is a segmented reduction done on the
    otherwise-idle MXU, and broadcast back with the transposed selector.
    """
    x = x_ref[...].astype(jnp.float32)
    d = x - bias_ref[...]
    d2 = d * d
    seg_sum = jnp.dot(d2, sel_ref[...], preferred_element_type=jnp.float32,
                      precision=lax.Precision.HIGHEST)       # (TM, g)
    inv = lax.rsqrt(seg_sum * (1.0 / channels)) * scale_ref[0]
    inv_b = jnp.dot(inv, selt_ref[...], preferred_element_type=jnp.float32,
                    precision=lax.Precision.HIGHEST)         # (TM, W)
    o_ref[...] = (x * inv_b).astype(o_ref.dtype)


def bias_norm(x, bias, log_scale, *, target_tile_bytes=4 << 20,
              max_block_rows=32768, max_packed_lanes=16384):
    """x: (S, B, C); bias: (C,); log_scale: scalar. Returns (S, B, C)."""
    S, B, C = x.shape
    N = S * B
    orig_dtype = x.dtype
    itemsize = jnp.dtype(orig_dtype).itemsize

    # Lane packing: fold g consecutive logical rows into the lane axis so the
    # packed width W = g*C is a multiple of 128 (lane-dense loads/stores).
    if C % 128 == 0:
        g = 1
    else:
        g = 128 // math.gcd(C, 128)
        if g * C > max_packed_lanes:       # pathological (e.g. large odd) C
            g = 1
    W = g * C

    x2 = x.reshape(N, C)
    tail = N % g
    if tail:
        # Micro-pad (< g rows) so the free row-major reshape to (N/g, W) is
        # valid; padded rows stay finite and are sliced off after the kernel.
        x2 = jnp.pad(x2, ((0, g - tail), (0, 0)), constant_values=1.0)
    Np = x2.shape[0] // g
    xp = x2.reshape(Np, W)                 # row-major reshape: no data movement

    # Sublane alignment for the block's second-to-last dim.
    row_align = {4: 8, 2: 16, 1: 32}.get(itemsize, 8)

    # Tile rows from an explicit byte budget (dtype-aware): double-buffered
    # in/out tiles + f32 temporaries stay well inside the 48 MiB scoped limit.
    rows_fit = max(row_align, target_tile_bytes // (W * itemsize))
    block_rows = min(max_block_rows, rows_fit)
    block_rows = max(row_align, (block_rows // row_align) * row_align)

    # Give multi-TensorCore chips (v7x) at least ~4 grid steps when there's work.
    min_steps = 4
    if pl.cdiv(Np, block_rows) < min_steps and Np > min_steps * row_align:
        block_rows = max(row_align, ((Np // min_steps) // row_align) * row_align)

    if block_rows >= Np:
        block_rows = Np                    # single full-extent block (always legal)

    grid = (pl.cdiv(Np, block_rows),)      # ragged last block: OOB writes masked

    bias_p = jnp.tile(bias.astype(jnp.float32), g).reshape(1, W)
    scale = jnp.exp(jnp.asarray(log_scale, jnp.float32)).reshape(1)  # hoisted exp

    in_specs = [
        pl.BlockSpec(memory_space=pltpu.MemorySpace.SMEM),    # exp(log_scale)
        pl.BlockSpec((1, W), lambda i: (0, 0)),               # bias (resident)
    ]
    args = [scale, bias_p]

    if g > 1:
        # Block-diagonal selector and its transpose, built once in the wrapper.
        seg_of_lane = jnp.arange(W, dtype=jnp.int32) // C
        sel = (seg_of_lane[:, None] == jnp.arange(g, dtype=jnp.int32)[None, :])
        sel = sel.astype(jnp.float32)                          # (W, g)
        sel_t = sel.T                                          # (g, W)
        in_specs += [pl.BlockSpec((W, g), lambda i: (0, 0)),
                     pl.BlockSpec((g, W), lambda i: (0, 0))]
        args += [sel, sel_t]
        kernel = functools.partial(_bias_norm_kernel_packed, channels=C)
    else:
        kernel = _bias_norm_kernel_dense

    in_specs += [pl.BlockSpec((block_rows, W), lambda i: (i, 0))]
    args += [xp]

    out = pl.pallas_call(
        kernel,
        out_shape=jax.ShapeDtypeStruct((Np, W), orig_dtype),
        grid_spec=pltpu.PrefetchScalarGridSpec(
            num_scalar_prefetch=0,
            grid=grid,
            in_specs=in_specs,
            out_specs=pl.BlockSpec((block_rows, W), lambda i: (i, 0)),
        ),
        compiler_params=pltpu.CompilerParams(
            dimension_semantics=("parallel",),
            vmem_limit_bytes=48 * 1024 * 1024,
        ),
    )(*args)

    out = out.reshape(Np * g, C)
    if tail:
        out = out[:N]
    return out.reshape(S, B, C)


def bias_norm_ref(x, bias, log_scale):
    """Pure-JAX reference matching the PyTorch forward."""
    xf = x.astype(jnp.float32)
    mean = jnp.mean((xf - bias.astype(jnp.float32)) ** 2, axis=2, keepdims=True)
    return (jnp.exp(jnp.float32(log_scale)) * (xf / jnp.sqrt(mean))).astype(x.dtype)


if __name__ == "__main__":
    key = jax.random.PRNGKey(0)
    k_x1, k_b1, k_x2, k_b2, k_x3, k_b3, k_x4, k_b4 = jax.random.split(key, 8)

    # Deterministic params matching the module's __init__:
    #   log_scale = 1.0 (scalar), bias ~ Normal(0, 0.0001) of shape (C,)
    log_scale = jnp.float32(1.0)

    # Case 1: small C (32) -> lane-packed path (g = 4, W = 128), seq=8, batch=2.
    S, B, C = 8, 2, 32
    bias1 = 0.0001 * jax.random.normal(k_b1, (C,), dtype=jnp.float32)
    x1 = jax.random.normal(k_x1, (S, B, C), dtype=jnp.float32)
    y1 = jax.block_until_ready(bias_norm(x1, bias1, log_scale))
    y1_ref = bias_norm_ref(x1, bias1, log_scale)
    assert y1.shape == (S, B, C)
    # HIGHEST-precision selector dots -> ~f32 accuracy on the packed path.
    assert jnp.allclose(y1, y1_ref, atol=1e-4, rtol=1e-4), "packed-path mismatch"

    # Case 2: C = 256 (multiple of 128) -> dense path (g = 1).
    S2, B2, C2 = 8, 2, 256
    bias2 = 0.0001 * jax.random.normal(k_b2, (C2,), dtype=jnp.float32)
    x2 = jax.random.normal(k_x2, (S2, B2, C2), dtype=jnp.float32)
    y2 = jax.block_until_ready(bias_norm(x2, bias2, log_scale))
    y2_ref = bias_norm_ref(x2, bias2, log_scale)
    assert jnp.allclose(y2, y2_ref, atol=1e-5, rtol=1e-5), "g=1 path mismatch"

    # Case 3: C = 192 (not a divisor of 128) -> generalized packing (g = 2,
    # W = 384) plus the micro-tail pad path (N = 21 is odd).
    S3, B3, C3 = 7, 3, 192
    bias3 = 0.0001 * jax.random.normal(k_b3, (C3,), dtype=jnp.float32)
    x3 = jax.random.normal(k_x3, (S3, B3, C3), dtype=jnp.float32)
    y3 = jax.block_until_ready(bias_norm(x3, bias3, log_scale))
    y3_ref = bias_norm_ref(x3, bias3, log_scale)
    assert jnp.allclose(y3, y3_ref, atol=1e-4, rtol=1e-4), "generalized-pack mismatch"

    # Case 4: multi-step grid with a ragged last block (N = 150, block_rows = 32)
    # exercising the cdiv grid / masked OOB writeback path.
    S4, B4, C4 = 25, 6, 256
    bias4 = 0.0001 * jax.random.normal(k_b4, (C4,), dtype=jnp.float32)
    x4 = jax.random.normal(k_x4, (S4, B4, C4), dtype=jnp.float32)
    y4 = jax.block_until_ready(bias_norm(x4, bias4, log_scale))
    y4_ref = bias_norm_ref(x4, bias4, log_scale)
    assert jnp.allclose(y4, y4_ref, atol=1e-5, rtol=1e-5), "ragged-grid mismatch"

    print("KERNEL_OK")
</pallas_src>

<mosaic_0001>
module attributes {stable_mosaic.version = 11 : i64} {
  func.func @_bias_norm_kernel_packed(%arg0: i32, %arg1: memref<1xf32, #tpu.memory_space<smem>>, %arg2: memref<1x128xf32, #tpu.memory_space<vmem>>, %arg3: memref<128x4xf32, #tpu.memory_space<vmem>>, %arg4: memref<4x128xf32, #tpu.memory_space<vmem>>, %arg5: memref<4x128xf32, #tpu.memory_space<vmem>>, %arg6: memref<4x128xf32, #tpu.memory_space<vmem>>) attributes {dimension_semantics = [#tpu.dimension_semantics<parallel>], iteration_bounds = array<i64: 1>, scalar_prefetch = 0 : i64, scratch_operands = 0 : i64, tpu.core_type = #tpu.core_type<tc>, window_params = [{transform_indices = @transform_0, window_bounds = array<i64: 1>}, {pipeline_mode = #tpu.pipeline_mode<synchronous>, transform_indices = @transform_1, window_bounds = array<i64: 1, 128>}, {pipeline_mode = #tpu.pipeline_mode<synchronous>, transform_indices = @transform_2, window_bounds = array<i64: 128, 4>}, {pipeline_mode = #tpu.pipeline_mode<synchronous>, transform_indices = @transform_3, window_bounds = array<i64: 4, 128>}, {transform_indices = @transform_4, window_bounds = array<i64: 4, 128>}, {transform_indices = @transform_5, window_bounds = array<i64: 4, 128>}]} {
    %c0 = arith.constant 0 : index
    %c0_0 = arith.constant 0 : index
    %0 = vector.load %arg5[%c0, %c0_0] : memref<4x128xf32, #tpu.memory_space<vmem>>, vector<4x128xf32>
    %c0_1 = arith.constant 0 : index
    %c0_2 = arith.constant 0 : index
    %1 = vector.load %arg2[%c0_1, %c0_2] : memref<1x128xf32, #tpu.memory_space<vmem>>, vector<1x128xf32>
    %2 = vector.broadcast %1 : vector<1x128xf32> to vector<4x128xf32>
    %3 = arith.subf %0, %2 : vector<4x128xf32>
    %4 = arith.mulf %3, %3 : vector<4x128xf32>
    %c0_3 = arith.constant 0 : index
    %c0_4 = arith.constant 0 : index
    %5 = vector.load %arg3[%c0_3, %c0_4] : memref<128x4xf32, #tpu.memory_space<vmem>>, vector<128x4xf32>
    %cst = arith.constant dense<0.000000e+00> : vector<4x4xf32>
    %6 = tpu.matmul %4, %5, %cst {dimension_numbers = #tpu.dot_dimension_numbers<[1], [0], [0], [1], [0, 0, 1, 1], [], []>, precision = #tpu.contract_precision<fp32>} : vector<4x128xf32>, vector<128x4xf32>, vector<4x4xf32> -> vector<4x4xf32>
    %cst_5 = arith.constant 3.125000e-02 : f32
    %7 = vector.broadcast %cst_5 : f32 to vector<4x4xf32>
    %8 = arith.mulf %6, %7 : vector<4x4xf32>
    %9 = math.rsqrt %8 : vector<4x4xf32>
    %c0_6 = arith.constant 0 : index
    %10 = memref.load %arg1[%c0_6] : memref<1xf32, #tpu.memory_space<smem>>
    %11 = vector.broadcast %10 : f32 to vector<4x4xf32>
    %12 = arith.mulf %9, %11 : vector<4x4xf32>
    %c0_7 = arith.constant 0 : index
    %c0_8 = arith.constant 0 : index
    %13 = vector.load %arg4[%c0_7, %c0_8] : memref<4x128xf32, #tpu.memory_space<vmem>>, vector<4x128xf32>
    %cst_9 = arith.constant dense<0.000000e+00> : vector<4x128xf32>
    %14 = tpu.matmul %12, %13, %cst_9 {dimension_numbers = #tpu.dot_dimension_numbers<[1], [0], [0], [1], [0, 0, 1, 1], [], []>, precision = #tpu.contract_precision<fp32>} : vector<4x4xf32>, vector<4x128xf32>, vector<4x128xf32> -> vector<4x128xf32>
    %15 = arith.mulf %0, %14 : vector<4x128xf32>
    %c0_10 = arith.constant 0 : index
    %c0_11 = arith.constant 0 : index
    %16 = vector.load %arg6[%c0_10, %c0_11] : memref<4x128xf32, #tpu.memory_space<vmem>>, vector<4x128xf32>
    tpu.vector_store %arg6[%c0_10, %c0_11], %15 {strides = array<i32>} : memref<4x128xf32, #tpu.memory_space<vmem>>, vector<4x128xf32>,
    return
  }
  func.func @transform_0(%arg0: i32) -> i32 {
    %c0_i32 = arith.constant 0 : i32
    %c0_i32_0 = arith.constant 0 : i32
    return %c0_i32 : i32
  }
  func.func @transform_1(%arg0: i32) -> (i32, i32) {
    %c0_i32 = arith.constant 0 : i32
    %c0_i32_0 = arith.constant 0 : i32
    %c0_i32_1 = arith.constant 0 : i32
    return %c0_i32, %c0_i32_0 : i32, i32
  }
  func.func @transform_2(%arg0: i32) -> (i32, i32) {
    %c0_i32 = arith.constant 0 : i32
    %c0_i32_0 = arith.constant 0 : i32
    %c0_i32_1 = arith.constant 0 : i32
    return %c0_i32, %c0_i32_0 : i32, i32
  }
  func.func @transform_3(%arg0: i32) -> (i32, i32) {
    %c0_i32 = arith.constant 0 : i32
    %c0_i32_0 = arith.constant 0 : i32
    %c0_i32_1 = arith.constant 0 : i32
    return %c0_i32, %c0_i32_0 : i32, i32
  }
  func.func @transform_4(%arg0: i32) -> (i32, i32) {
    %c0_i32 = arith.constant 0 : i32
    %c0_i32_0 = arith.constant 0 : i32
    return %arg0, %c0_i32 : i32, i32
  }
  func.func @transform_5(%arg0: i32) -> (i32, i32) {
    %c0_i32 = arith.constant 0 : i32
    %c0_i32_0 = arith.constant 0 : i32
    return %arg0, %c0_i32 : i32, i32
  }
}

</mosaic_0001>

<llo_original>
// kernel: tpu_custom_call.1
$region0: #{tpu_custom_call.1}
  #allocation0 [shape = 'u32[]', space=smem, size = 0x4, offset = 0x4, fixed_abs, tag = 'smem constant byte address 0x4 - core index']
  #allocation1 [shape = 'u32[72,128]{1,0:T(1,128)}', space=vmem, size = 0x9000, scoped, tag = 'internal scratch']
  #allocation2 [shape = 'f32[1]{0:T(128)S(6)}', space=smem, size = 0x200, scoped, tag = 'scoped memory for tpu_custom_call.1']
  %s0 = inlined_call_operand.<no memory space> [shape: f32[1], index: 0, kind: input, shape index: {}]
  %s1 = inlined_call_operand.vmem [shape: f32[1,128], index: 1, kind: input, shape index: {}]
  %s2 = inlined_call_operand.vmem [shape: f32[128,4], index: 2, kind: input, shape index: {}]
  %s3 = inlined_call_operand.vmem [shape: f32[4,128], index: 3, kind: input, shape index: {}]
  %s4 = inlined_call_operand.vmem [shape: f32[4,128], index: 4, kind: input, shape index: {}]
  %s5 = inlined_call_operand.hbm [shape: f32[4,128], index: 5, kind: output, shape index: {}]
  %s6 = sld [smem:[#allocation0]]
  $region30: #{tpu_custom_call.1} parent=0
    _
  %s8 = ssub.s32 1, %s6
  %s9 = scalar_select 0, %s8, %s6
  %10 = sst [smem:[#allocation2]] %s0
  $region1: #{tpu_custom_call.1} parent=0
    #allocation3 [shape = 'u8[2048]{0}', space=vmem, size = 0x800, scoped, tag = 'output window, operand 0, single buffered']
    #allocation4 [shape = 's32[1]{0}', space=sflag, size = 0x4, scoped, tag = 'scoped memory for tpu_custom_call.1']
    %11 = vsyncpa [#allocation4], 0
    // Predicated region
    $region2: #{tpu_custom_call.1} parent=1 // pred_check
      _
    $region3: #{tpu_custom_call.1} parent=1 // pred_check_branch
      %13 = sbr.rel (0) target = $region5
    $region4: #{tpu_custom_call.1} parent=1 // pred_region
      _
    $region5: #{tpu_custom_call.1} parent=1 // pred_fallthru
      _
    // Predicated region
    $region6: #{tpu_custom_call.1} parent=1 // pred_check
      _
    $region7: #{tpu_custom_call.1} parent=1 // pred_check_branch
      %15 = sbr.rel (0) target = $region9
    $region8: #{tpu_custom_call.1} parent=1 // pred_region
      _
    $region9: #{tpu_custom_call.1} parent=1 // pred_fallthru
      _
    // Predicated region
    $region10: #{tpu_custom_call.1} parent=1 // pred_check
      _
    $region11: #{tpu_custom_call.1} parent=1 // pred_check_branch
      %17 = sbr.rel (0) target = $region13
    $region12: #{tpu_custom_call.1} parent=1 // pred_region
      _
    $region13: #{tpu_custom_call.1} parent=1 // pred_fallthru
      _
    // Predicated region
    $region14: #{tpu_custom_call.1} parent=1 // pred_check
      _
    $region15: #{tpu_custom_call.1} parent=1 // pred_check_branch
      %19 = sbr.rel (0) target = $region17
    $region16: #{tpu_custom_call.1} parent=1 // pred_region
      _
    $region17: #{tpu_custom_call.1} parent=1 // pred_fallthru
      _
    // Predicated region
    $region18: #{tpu_custom_call.1} parent=1 // pred_check
      _
    $region19: #{tpu_custom_call.1} parent=1 // pred_check_branch
      %21 = sbr.rel (0) target = $region21
    $region20: #{tpu_custom_call.1} parent=1 // pred_region
      _
    $region21: #{tpu_custom_call.1} parent=1 // pred_fallthru
      _
    %v22 = vld [vmem:[%s4] sm:$0xf]
    %v23 = vld [vmem:[%s1] sm:$0x1]
    %v25 = vperm.slane %v23, 0
    %v27 = vsub.f32 %v22, %v25
    %v28 = vmul.f32 %v27, %v27
    %v29 = vld [vmem:[%s2] sm:$0xff]
    %v30 = vld [vmem:[%s2 + $0x8] sm:$0xff]
    %v31 = vld [vmem:[%s2 + $0x10] sm:$0xff]
    %v32 = vld [vmem:[%s2 + $0x18] sm:$0xff]
    %v33 = vld [vmem:[%s2 + $0x20] sm:$0xff]
    %v34 = vld [vmem:[%s2 + $0x28] sm:$0xff]
    %v35 = vld [vmem:[%s2 + $0x30] sm:$0xff]
    %v36 = vld [vmem:[%s2 + $0x38] sm:$0xff]
    %v37 = vld [vmem:[%s2 + $0x40] sm:$0xff]
    %v38 = vld [vmem:[%s2 + $0x48] sm:$0xff]
    %v39 = vld [vmem:[%s2 + $0x50] sm:$0xff]
    %v40 = vld [vmem:[%s2 + $0x58] sm:$0xff]
    %v41 = vld [vmem:[%s2 + $0x60] sm:$0xff]
    %v42 = vld [vmem:[%s2 + $0x68] sm:$0xff]
    %v43 = vld [vmem:[%s2 + $0x70] sm:$0xff]
    %v44 = vld [vmem:[%s2 + $0x78] sm:$0xff]
    %v45 = vand.u32 %v44, 4294901760
    %46 = vmatpush.msra.mxu0 %v45
    %v47 = vand.u32 %v43, 4294901760
    %48 = vmatpush.msra.mxu0 %v47
    %v49 = vand.u32 %v42, 4294901760
    %50 = vmatpush.msra.mxu0 %v49
    %v51 = vand.u32 %v41, 4294901760
    %52 = vmatpush.msra.mxu0 %v51
    %v53 = vand.u32 %v40, 4294901760
    %54 = vmatpush.msra.mxu0 %v53
    %v55 = vand.u32 %v39, 4294901760
    %56 = vmatpush.msra.mxu0 %v55
    %v57 = vand.u32 %v38, 4294901760
    %58 = vmatpush.msra.mxu0 %v57
    %v59 = vand.u32 %v37, 4294901760
    %60 = vmatpush.msra.mxu0 %v59
    %v61 = vand.u32 %v36, 4294901760
    %62 = vmatpush.msra.mxu0 %v61
    %v63 = vand.u32 %v35, 4294901760
    %64 = vmatpush.msra.mxu0 %v63
    %v65 = vand.u32 %v34, 4294901760
    %66 = vmatpush.msra.mxu0 %v65
    %v67 = vand.u32 %v33, 4294901760
    %68 = vmatpush.msra.mxu0 %v67
    %v69 = vand.u32 %v32, 4294901760
    %70 = vmatpush.msra.mxu0 %v69
    %v71 = vand.u32 %v31, 4294901760
    %72 = vmatpush.msra.mxu0 %v71
    %v73 = vand.u32 %v30, 4294901760
    %74 = vmatpush.msra.mxu0 %v73
    %v75 = vand.u32 %v29, 4294901760
    %76 = vmatpush.msra.mxu0 %v75
    %v77 = vand.u32 %v28, 4294901760
    %v78 = vsub.f32 %v28, %v77
    %v79 = vand.u32 %v78, 4294901760
    %v80 = vsub.f32 %v78, %v79
    %v81 = vand.u32 %v80, 4294901760
    %82 = vmatmul.f32.gmra.mxu0 %v81
    %v83 = vpop.f32.mrf.mxu0
    %v84 = vadd.f32 0.0, %v83
    %85 = vdwg.mxu0
    %v86 = vand.u32 %v44, 4294901760
    %v87 = vsub.f32 %v44, %v86
    %v88 = vand.u32 %v87, 4294901760
    %v89 = vsub.f32 %v87, %v88
    %v90 = vand.u32 %v89, 4294901760
    %91 = vmatpush.msra.mxu0 %v90
    %v92 = vand.u32 %v43, 4294901760
    %v93 = vsub.f32 %v43, %v92
    %v94 = vand.u32 %v93, 4294901760
    %v95 = vsub.f32 %v93, %v94
    %v96 = vand.u32 %v95, 4294901760
    %97 = vmatpush.msra.mxu0 %v96
    %v98 = vand.u32 %v42, 4294901760
    %v99 = vsub.f32 %v42, %v98
    %v100 = vand.u32 %v99, 4294901760
    %v101 = vsub.f32 %v99, %v100
    %v102 = vand.u32 %v101, 4294901760
    %103 = vmatpush.msra.mxu0 %v102
    %v104 = vand.u32 %v41, 4294901760
    %v105 = vsub.f32 %v41, %v104
    %v106 = vand.u32 %v105, 4294901760
    %v107 = vsub.f32 %v105, %v106
    %v108 = vand.u32 %v107, 4294901760
    %109 = vmatpush.msra.mxu0 %v108
    %v110 = vand.u32 %v40, 4294901760
    %v111 = vsub.f32 %v40, %v110
    %v112 = vand.u32 %v111, 4294901760
    %v113 = vsub.f32 %v111, %v112
    %v114 = vand.u32 %v113, 4294901760
    %115 = vmatpush.msra.mxu0 %v114
    %v116 = vand.u32 %v39, 4294901760
    %v117 = vsub.f32 %v39, %v116
    %v118 = vand.u32 %v117, 4294901760
    %v119 = vsub.f32 %v117, %v118
    %v120 = vand.u32 %v119, 4294901760
    %121 = vmatpush.msra.mxu0 %v120
    %v122 = vand.u32 %v38, 4294901760
    %v123 = vsub.f32 %v38, %v122
    %v124 = vand.u32 %v123, 4294901760
    %v125 = vsub.f32 %v123, %v124
    %v126 = vand.u32 %v125, 4294901760
    %127 = vmatpush.msra.mxu0 %v126
    %v128 = vand.u32 %v37, 4294901760
    %v129 = vsub.f32 %v37, %v128
    %v130 = vand.u32 %v129, 4294901760
    %v131 = vsub.f32 %v129, %v130
    %v132 = vand.u32 %v131, 4294901760
    %133 = vmatpush.msra.mxu0 %v132
    %v134 = vand.u32 %v36, 4294901760
    %v135 = vsub.f32 %v36, %v134
    %v136 = vand.u32 %v135, 4294901760
    %v137 = vsub.f32 %v135, %v136
    %v138 = vand.u32 %v137, 4294901760
    %139 = vmatpush.msra.mxu0 %v138
    %v140 = vand.u32 %v35, 4294901760
    %v141 = vsub.f32 %v35, %v140
    %v142 = vand.u32 %v141, 4294901760
    %v143 = vsub.f32 %v141, %v142
    %v144 = vand.u32 %v143, 4294901760
    %145 = vmatpush.msra.mxu0 %v144
    %v146 = vand.u32 %v34, 4294901760
    %v147 = vsub.f32 %v34, %v146
    %v148 = vand.u32 %v147, 4294901760
    %v149 = vsub.f32 %v147, %v148
    %v150 = vand.u32 %v149, 4294901760
    %151 = vmatpush.msra.mxu0 %v150
    %v152 = vand.u32 %v33, 4294901760
    %v153 = vsub.f32 %v33, %v152
    %v154 = vand.u32 %v153, 4294901760
    %v155 = vsub.f32 %v153, %v154
    %v156 = vand.u32 %v155, 4294901760
    %157 = vmatpush.msra.mxu0 %v156
    %v158 = vand.u32 %v32, 4294901760
    %v159 = vsub.f32 %v32, %v158
    %v160 = vand.u32 %v159, 4294901760
    %v161 = vsub.f32 %v159, %v160
    %v162 = vand.u32 %v161, 4294901760
    %163 = vmatpush.msra.mxu0 %v162
    %v164 = vand.u32 %v31, 4294901760
    %v165 = vsub.f32 %v31, %v164
    %v166 = vand.u32 %v165, 4294901760
    %v167 = vsub.f32 %v165, %v166
    %v168 = vand.u32 %v167, 4294901760
    %169 = vmatpush.msra.mxu0 %v168
    %v170 = vand.u32 %v30, 4294901760
    %v171 = vsub.f32 %v30, %v170
    %v172 = vand.u32 %v171, 4294901760
    %v173 = vsub.f32 %v171, %v172
    %v174 = vand.u32 %v173, 4294901760
    %175 = vmatpush.msra.mxu0 %v174
    %v176 = vand.u32 %v29, 4294901760
    %v177 = vsub.f32 %v29, %v176
    %v178 = vand.u32 %v177, 4294901760
    %v179 = vsub.f32 %v177, %v178
    %v180 = vand.u32 %v179, 4294901760
    %181 = vmatpush.msra.mxu0 %v180
    %v182 = vand.u32 %v28, 4294901760
    %183 = vmatmul.f32.gmra.mxu0 %v182
    %v184 = vpop.f32.mrf.mxu0
    %v185 = vadd.f32 %v84, %v184
    %186 = vdwg.mxu0
    %v187 = vand.u32 %v44, 4294901760
    %v188 = vsub.f32 %v44, %v187
    %189 = vmatpush.msra.mxu0 %v188
    %v190 = vand.u32 %v43, 4294901760
    %v191 = vsub.f32 %v43, %v190
    %192 = vmatpush.msra.mxu0 %v191
    %v193 = vand.u32 %v42, 4294901760
    %v194 = vsub.f32 %v42, %v193
    %195 = vmatpush.msra.mxu0 %v194
    %v196 = vand.u32 %v41, 4294901760
    %v197 = vsub.f32 %v41, %v196
    %198 = vmatpush.msra.mxu0 %v197
    %v199 = vand.u32 %v40, 4294901760
    %v200 = vsub.f32 %v40, %v199
    %201 = vmatpush.msra.mxu0 %v200
    %v202 = vand.u32 %v39, 4294901760
    %v203 = vsub.f32 %v39, %v202
    %204 = vmatpush.msra.mxu0 %v203
    %v205 = vand.u32 %v38, 4294901760
    %v206 = vsub.f32 %v38, %v205
    %207 = vmatpush.msra.mxu0 %v206
    %v208 = vand.u32 %v37, 4294901760
    %v209 = vsub.f32 %v37, %v208
    %210 = vmatpush.msra.mxu0 %v209
    %v211 = vand.u32 %v36, 4294901760
    %v212 = vsub.f32 %v36, %v211
    %213 = vmatpush.msra.mxu0 %v212
    %v214 = vand.u32 %v35, 4294901760
    %v215 = vsub.f32 %v35, %v214
    %216 = vmatpush.msra.mxu0 %v215
    %v217 = vand.u32 %v34, 4294901760
    %v218 = vsub.f32 %v34, %v217
    %219 = vmatpush.msra.mxu0 %v218
    %v220 = vand.u32 %v33, 4294901760
    %v221 = vsub.f32 %v33, %v220
    %222 = vmatpush.msra.mxu0 %v221
    %v223 = vand.u32 %v32, 4294901760
    %v224 = vsub.f32 %v32, %v223
    %225 = vmatpush.msra.mxu0 %v224
    %v226 = vand.u32 %v31, 4294901760
    %v227 = vsub.f32 %v31, %v226
    %228 = vmatpush.msra.mxu0 %v227
    %v229 = vand.u32 %v30, 4294901760
    %v230 = vsub.f32 %v30, %v229
    %231 = vmatpush.msra.mxu0 %v230
    %v232 = vand.u32 %v29, 4294901760
    %v233 = vsub.f32 %v29, %v232
    %234 = vmatpush.msra.mxu0 %v233
    %v235 = vand.u32 %v28, 4294901760
    %v236 = vsub.f32 %v28, %v235
    %237 = vmatmul.f32.gmra.mxu0 %v236
    %v238 = vpop.f32.mrf.mxu0
    %v239 = vadd.f32 %v185, %v238
    %240 = vdwg.mxu0
    %v241 = vand.u32 %v44, 4294901760
    %242 = vmatpush.msra.mxu0 %v241
    %v243 = vand.u32 %v43, 4294901760
    %244 = vmatpush.msra.mxu0 %v243
    %v245 = vand.u32 %v42, 4294901760
    %246 = vmatpush.msra.mxu0 %v245
    %v247 = vand.u32 %v41, 4294901760
    %248 = vmatpush.msra.mxu0 %v247
    %v249 = vand.u32 %v40, 4294901760
    %250 = vmatpush.msra.mxu0 %v249
    %v251 = vand.u32 %v39, 4294901760
    %252 = vmatpush.msra.mxu0 %v251
    %v253 = vand.u32 %v38, 4294901760
    %254 = vmatpush.msra.mxu0 %v253
    %v255 = vand.u32 %v37, 4294901760
    %256 = vmatpush.msra.mxu0 %v255
    %v257 = vand.u32 %v36, 4294901760
    %258 = vmatpush.msra.mxu0 %v257
    %v259 = vand.u32 %v35, 4294901760
    %260 = vmatpush.msra.mxu0 %v259
    %v261 = vand.u32 %v34, 4294901760
    %262 = vmatpush.msra.mxu0 %v261
    %v263 = vand.u32 %v33, 4294901760
    %264 = vmatpush.msra.mxu0 %v263
    %v265 = vand.u32 %v32, 4294901760
    %266 = vmatpush.msra.mxu0 %v265
    %v267 = vand.u32 %v31, 4294901760
    %268 = vmatpush.msra.mxu0 %v267
    %v269 = vand.u32 %v30, 4294901760
    %270 = vmatpush.msra.mxu0 %v269
    %v271 = vand.u32 %v29, 4294901760
    %272 = vmatpush.msra.mxu0 %v271
    %v273 = vand.u32 %v28, 4294901760
    %v274 = vsub.f32 %v28, %v273
    %v275 = vand.u32 %v274, 4294901760
    %276 = vmatmul.f32.gmra.mxu0 %v275
    %v277 = vpop.f32.mrf.mxu0
    %v278 = vadd.f32 %v239, %v277
    %279 = vdwg.mxu0
    %v280 = vand.u32 %v44, 4294901760
    %v281 = vsub.f32 %v44, %v280
    %v282 = vand.u32 %v281, 4294901760
    %283 = vmatpush.msra.mxu0 %v282
    %v284 = vand.u32 %v43, 4294901760
    %v285 = vsub.f32 %v43, %v284
    %v286 = vand.u32 %v285, 4294901760
    %287 = vmatpush.msra.mxu0 %v286
    %v288 = vand.u32 %v42, 4294901760
    %v289 = vsub.f32 %v42, %v288
    %v290 = vand.u32 %v289, 4294901760
    %291 = vmatpush.msra.mxu0 %v290
    %v292 = vand.u32 %v41, 4294901760
    %v293 = vsub.f32 %v41, %v292
    %v294 = vand.u32 %v293, 4294901760
    %295 = vmatpush.msra.mxu0 %v294
    %v296 = vand.u32 %v40, 4294901760
    %v297 = vsub.f32 %v40, %v296
    %v298 = vand.u32 %v297, 4294901760
    %299 = vmatpush.msra.mxu0 %v298
    %v300 = vand.u32 %v39, 4294901760
    %v301 = vsub.f32 %v39, %v300
    %v302 = vand.u32 %v301, 4294901760
    %303 = vmatpush.msra.mxu0 %v302
    %v304 = vand.u32 %v38, 4294901760
    %v305 = vsub.f32 %v38, %v304
    %v306 = vand.u32 %v305, 4294901760
    %307 = vmatpush.msra.mxu0 %v306
    %v308 = vand.u32 %v37, 4294901760
    %v309 = vsub.f32 %v37, %v308
    %v310 = vand.u32 %v309, 4294901760
    %311 = vmatpush.msra.mxu0 %v310
    %v312 = vand.u32 %v36, 4294901760
    %v313 = vsub.f32 %v36, %v312
    %v314 = vand.u32 %v313, 4294901760
    %315 = vmatpush.msra.mxu0 %v314
    %v316 = vand.u32 %v35, 4294901760
    %v317 = vsub.f32 %v35, %v316
    %v318 = vand.u32 %v317, 4294901760
    %319 = vmatpush.msra.mxu0 %v318
    %v320 = vand.u32 %v34, 4294901760
    %v321 = vsub.f32 %v34, %v320
    %v322 = vand.u32 %v321, 4294901760
    %323 = vmatpush.msra.mxu0 %v322
    %v324 = vand.u32 %v33, 4294901760
    %v325 = vsub.f32 %v33, %v324
    %v326 = vand.u32 %v325, 4294901760
    %327 = vmatpush.msra.mxu0 %v326
    %v328 = vand.u32 %v32, 4294901760
    %v329 = vsub.f32 %v32, %v328
    %v330 = vand.u32 %v329, 4294901760
    %331 = vmatpush.msra.mxu0 %v330
    %v332 = vand.u32 %v31, 4294901760
    %v333 = vsub.f32 %v31, %v332
    %v334 = vand.u32 %v333, 4294901760
    %335 = vmatpush.msra.mxu0 %v334
    %v336 = vand.u32 %v30, 4294901760
    %v337 = vsub.f32 %v30, %v336
    %v338 = vand.u32 %v337, 4294901760
    %339 = vmatpush.msra.mxu0 %v338
    %v340 = vand.u32 %v29, 4294901760
    %v341 = vsub.f32 %v29, %v340
    %v342 = vand.u32 %v341, 4294901760
    %343 = vmatpush.msra.mxu0 %v342
    %v344 = vand.u32 %v28, 4294901760
    %345 = vmatmul.f32.gmra.mxu0 %v344
    %v346 = vpop.f32.mrf.mxu0
    %v347 = vadd.f32 %v278, %v346
    %348 = vdwg.mxu0
    %v349 = vand.u32 %v44, 4294901760
    %350 = vmatpush.msra.mxu0 %v349
    %v351 = vand.u32 %v43, 4294901760
    %352 = vmatpush.msra.mxu0 %v351
    %v353 = vand.u32 %v42, 4294901760
    %354 = vmatpush.msra.mxu0 %v353
    %v355 = vand.u32 %v41, 4294901760
    %356 = vmatpush.msra.mxu0 %v355
    %v357 = vand.u32 %v40, 4294901760
    %358 = vmatpush.msra.mxu0 %v357
    %v359 = vand.u32 %v39, 4294901760
    %360 = vmatpush.msra.mxu0 %v359
    %v361 = vand.u32 %v38, 4294901760
    %362 = vmatpush.msra.mxu0 %v361
    %v363 = vand.u32 %v37, 4294901760
    %364 = vmatpush.msra.mxu0 %v363
    %v365 = vand.u32 %v36, 4294901760
    %366 = vmatpush.msra.mxu0 %v365
    %v367 = vand.u32 %v35, 4294901760
    %368 = vmatpush.msra.mxu0 %v367
    %v369 = vand.u32 %v34, 4294901760
    %370 = vmatpush.msra.mxu0 %v369
    %v371 = vand.u32 %v33, 4294901760
    %372 = vmatpush.msra.mxu0 %v371
    %v373 = vand.u32 %v32, 4294901760
    %374 = vmatpush.msra.mxu0 %v373
    %v375 = vand.u32 %v31, 4294901760
    %376 = vmatpush.msra.mxu0 %v375
    %v377 = vand.u32 %v30, 4294901760
    %378 = vmatpush.msra.mxu0 %v377
    %v379 = vand.u32 %v29, 4294901760
    %380 = vmatpush.msra.mxu0 %v379
    %v381 = vand.u32 %v28, 4294901760
    %382 = vmatmul.f32.gmra.mxu0 %v381
    %v383 = vpop.f32.mrf.mxu0
    %v384 = vadd.f32 %v347, %v383
    %385 = vdwg.mxu0
    %v386 = vmul.f32 %v384, 0.03125
    %v387 = vrsqrt.pop %v386
    %v388 = vmul.f32 %v387, %v386
    %v389 = vmul.f32 %v388, %v387
    %v390 = vmul.f32 0.5, %v389
    %v391 = vsub.f32 1.5, %v390
    %v392 = vmul.f32 %v387, %v391
    %vm393 = vweird.f32 %v386
    %vm394 = vweird.f32 %v387
    %vm395 = vmor %vm393, %vm394
    %v396 = vsel %vm395, %v387, %v392
    %s397 = sld [smem:[#allocation2]]
    %v398 = vstv %s397
    %v399 = vmul.f32 %v396, %v398
    %v400 = vld [vmem:[%s3] sm:$0xf]
    %vm401 = vcmask 31744
    %v403 = vsel %vm401, %v399, 0
    %vm405 = vcmask 1043456
    %v407 = vsel %vm405, %v400, 0
    %409 = vmatpush.msra.mxu0 0.0
    %410 = vmatpush.msra.mxu0 0.0
    %411 = vmatpush.msra.mxu0 0.0
    %412 = vmatpush.msra.mxu0 0.0
    %413 = vmatpush.msra.mxu0 0.0
    %414 = vmatpush.msra.mxu0 0.0
    %415 = vmatpush.msra.mxu0 0.0
    %416 = vmatpush.msra.mxu0 0.0
    %417 = vmatpush.msra.mxu0 0.0
    %418 = vmatpush.msra.mxu0 0.0
    %419 = vmatpush.msra.mxu0 0.0
    %420 = vmatpush.msra.mxu0 0.0
    %421 = vmatpush.msra.mxu0 0.0
    %422 = vmatpush.msra.mxu0 0.0
    %423 = vmatpush.msra.mxu0 0.0
    %v424 = vand.u32 %v407, 4294901760
    %425 = vmatpush.msra.mxu0 %v424
    %v426 = vand.u32 %v403, 4294901760
    %v427 = vsub.f32 %v403, %v426
    %v428 = vand.u32 %v427, 4294901760
    %v429 = vsub.f32 %v427, %v428
    %v430 = vand.u32 %v429, 4294901760
    %431 = vmatmul.f32.gmra.mxu0 %v430
    %v432 = vpop.f32.mrf.mxu0
    %v433 = vadd.f32 0.0, %v432
    %434 = vdwg.mxu0
    %435 = vmatpush.msra.mxu0 0.0
    %436 = vmatpush.msra.mxu0 0.0
    %437 = vmatpush.msra.mxu0 0.0
    %438 = vmatpush.msra.mxu0 0.0
    %439 = vmatpush.msra.mxu0 0.0
    %440 = vmatpush.msra.mxu0 0.0
    %441 = vmatpush.msra.mxu0 0.0
    %442 = vmatpush.msra.mxu0 0.0
    %443 = vmatpush.msra.mxu0 0.0
    %444 = vmatpush.msra.mxu0 0.0
    %445 = vmatpush.msra.mxu0 0.0
    %446 = vmatpush.msra.mxu0 0.0
    %447 = vmatpush.msra.mxu0 0.0
    %448 = vmatpush.msra.mxu0 0.0
    %449 = vmatpush.msra.mxu0 0.0
    %v450 = vand.u32 %v407, 4294901760
    %v451 = vsub.f32 %v407, %v450
    %v452 = vand.u32 %v451, 4294901760
    %v453 = vsub.f32 %v451, %v452
    %v454 = vand.u32 %v453, 4294901760
    %455 = vmatpush.msra.mxu0 %v454
    %v456 = vand.u32 %v403, 4294901760
    %457 = vmatmul.f32.gmra.mxu0 %v456
    %v458 = vpop.f32.mrf.mxu0
    %v459 = vadd.f32 %v433, %v458
    %460 = vdwg.mxu0
    %461 = vmatpush.msra.mxu0 0.0
    %462 = vmatpush.msra.mxu0 0.0
    %463 = vmatpush.msra.mxu0 0.0
    %464 = vmatpush.msra.mxu0 0.0
    %465 = vmatpush.msra.mxu0 0.0
    %466 = vmatpush.msra.mxu0 0.0
    %467 = vmatpush.msra.mxu0 0.0
    %468 = vmatpush.msra.mxu0 0.0
    %469 = vmatpush.msra.mxu0 0.0
    %470 = vmatpush.msra.mxu0 0.0
    %471 = vmatpush.msra.mxu0 0.0
    %472 = vmatpush.msra.mxu0 0.0
    %473 = vmatpush.msra.mxu0 0.0
    %474 = vmatpush.msra.mxu0 0.0
    %475 = vmatpush.msra.mxu0 0.0
    %v476 = vand.u32 %v407, 4294901760
    %v477 = vsub.f32 %v407, %v476
    %478 = vmatpush.msra.mxu0 %v477
    %v479 = vand.u32 %v403, 4294901760
    %v480 = vsub.f32 %v403, %v479
    %481 = vmatmul.f32.gmra.mxu0 %v480
    %v482 = vpop.f32.mrf.mxu0
    %v483 = vadd.f32 %v459, %v482
    %484 = vdwg.mxu0
    %485 = vmatpush.msra.mxu0 0.0
    %486 = vmatpush.msra.mxu0 0.0
    %487 = vmatpush.msra.mxu0 0.0
    %488 = vmatpush.msra.mxu0 0.0
    %489 = vmatpush.msra.mxu0 0.0
    %490 = vmatpush.msra.mxu0 0.0
    %491 = vmatpush.msra.mxu0 0.0
    %492 = vmatpush.msra.mxu0 0.0
    %493 = vmatpush.msra.mxu0 0.0
    %494 = vmatpush.msra.mxu0 0.0
    %495 = vmatpush.msra.mxu0 0.0
    %496 = vmatpush.msra.mxu0 0.0
    %497 = vmatpush.msra.mxu0 0.0
    %498 = vmatpush.msra.mxu0 0.0
    %499 = vmatpush.msra.mxu0 0.0
    %v500 = vand.u32 %v407, 4294901760
    %501 = vmatpush.msra.mxu0 %v500
    %v502 = vand.u32 %v403, 4294901760
    %v503 = vsub.f32 %v403, %v502
    %v504 = vand.u32 %v503, 4294901760
    %505 = vmatmul.f32.gmra.mxu0 %v504
    %v506 = vpop.f32.mrf.mxu0
    %v507 = vadd.f32 %v483, %v506
    %508 = vdwg.mxu0
    %509 = vmatpush.msra.mxu0 0.0
    %510 = vmatpush.msra.mxu0 0.0
    %511 = vmatpush.msra.mxu0 0.0
    %512 = vmatpush.msra.mxu0 0.0
    %513 = vmatpush.msra.mxu0 0.0
    %514 = vmatpush.msra.mxu0 0.0
    %515 = vmatpush.msra.mxu0 0.0
    %516 = vmatpush.msra.mxu0 0.0
    %517 = vmatpush.msra.mxu0 0.0
    %518 = vmatpush.msra.mxu0 0.0
    %519 = vmatpush.msra.mxu0 0.0
    %520 = vmatpush.msra.mxu0 0.0
    %521 = vmatpush.msra.mxu0 0.0
    %522 = vmatpush.msra.mxu0 0.0
    %523 = vmatpush.msra.mxu0 0.0
    %v524 = vand.u32 %v407, 4294901760
    %v525 = vsub.f32 %v407, %v524
    %v526 = vand.u32 %v525, 4294901760
    %527 = vmatpush.msra.mxu0 %v526
    %v528 = vand.u32 %v403, 4294901760
    %529 = vmatmul.f32.gmra.mxu0 %v528
    %v530 = vpop.f32.mrf.mxu0
    %v531 = vadd.f32 %v507, %v530
    %532 = vdwg.mxu0
    %533 = vmatpush.msra.mxu0 0.0
    %534 = vmatpush.msra.mxu0 0.0
    %535 = vmatpush.msra.mxu0 0.0
    %536 = vmatpush.msra.mxu0 0.0
    %537 = vmatpush.msra.mxu0 0.0
    %538 = vmatpush.msra.mxu0 0.0
    %539 = vmatpush.msra.mxu0 0.0
    %540 = vmatpush.msra.mxu0 0.0
    %541 = vmatpush.msra.mxu0 0.0
    %542 = vmatpush.msra.mxu0 0.0
    %543 = vmatpush.msra.mxu0 0.0
    %544 = vmatpush.msra.mxu0 0.0
    %545 = vmatpush.msra.mxu0 0.0
    %546 = vmatpush.msra.mxu0 0.0
    %547 = vmatpush.msra.mxu0 0.0
    %v548 = vand.u32 %v407, 4294901760
    %549 = vmatpush.msra.mxu0 %v548
    %v550 = vand.u32 %v403, 4294901760
    %551 = vmatmul.f32.gmra.mxu0 %v550
    %v552 = vpop.f32.mrf.mxu0
    %v553 = vadd.f32 %v531, %v552
    %554 = vdwg.mxu0
    %v555 = vmul.f32 %v22, %v553
    %556 = vst [vmem:[#allocation3] sm:$0xf] %v555
    // Predicated region
    $region22: #{tpu_custom_call.1} parent=1 // pred_check
      _
    $region23: #{tpu_custom_call.1} parent=1 // pred_check_branch
      %558 = sbr.rel (0) target = $region25
    $region24: #{tpu_custom_call.1} parent=1 // pred_region
      %560 = vsyncadd [#allocation4], 0
      %s562 = sshll.u32 [#allocation3], 4
      %s563 = int_to_ptr.vmem [resolvable:$true] %s562
      %s564 = sshll.u32 %s5, 4
      %s565 = int_to_ptr.hbm [resolvable:$true] %s564
      %567 = dma.vmem_to_hbm [thread:$0]  %s563, 64, %s565, [#allocation4]
    $region25: #{tpu_custom_call.1} parent=1 // pred_fallthru
      _
    // Predicated region
    $region26: #{tpu_custom_call.1} parent=1 // pred_check
      _
    $region27: #{tpu_custom_call.1} parent=1 // pred_check_branch
      %569 = sbr.rel (0) target = $region29
    $region28: #{tpu_custom_call.1} parent=1 // pred_region
      %571 = dma.done [#allocation4], 64
    $region29: #{tpu_custom_call.1} parent=1 // pred_fallthru
      _
    %572 = vsyncpa [#allocation4], 1

</llo_original>
